<compile_context>
chip_gen: v6e
topology: v6e:2x2x1
jax: 0.10.0
libtpu: 0.0.40
codegen_flags: <defaults>
</compile_context>

<pallas_src>
import numpy as np
import jax
import jax.numpy as jnp
from jax import lax
from jax.experimental import pallas as pl
from jax.experimental.pallas import tpu as pltpu

# Problem sizes implied by the module (x1 = torch.randn(1, 3, 8)).
N, C_IN, L = 1, 3, 8
C_OUT, K = 8, 3
STRIDE, PAD = 1, 0
L_OUT = (L - 1) * STRIDE - 2 * PAD + K        # 10
L_PAD = L + 2 * (K - 1)                       # 12 (full padding -> valid correlation)
LIN_OUT = 3

# ---- Packed static-parameter slab (single parameter DMA, built once at setup) ----
#   rows [R_S,  R_S+L_PAD)   cols [0, L)       : one-hot gather matrix, S[i, l] = (l == i-(K-1))
#   rows [R_WC, R_WC+C_IN*K) cols [0, C_OUT)   : conv weight rows, Wc[c*K+k, o] = w_ct[c, o, k]
#   row   R_BC               cols [0, C_OUT)   : conv-transpose bias
#   rows [R_WL, R_WL+C_OUT)  cols [0, LIN_OUT) : linear weight rows, Wl[o, j] = w_lin[j, o]
#   row   R_BL               cols [0, LIN_OUT) : linear bias
R_S = 0
R_WC = R_S + L_PAD              # 12
R_BC = R_WC + C_IN * K          # 21
R_WL = R_BC + 1                 # 22
R_BL = R_WL + C_OUT             # 30
P_ROWS = R_BL + 1               # 31
P_COLS = max(C_OUT, L)          # 8


def fused_kernel(x_ref, p_ref, o_ref):
    # x_ref: (1, C_IN, L)      raw channels-first input (no wrapper-side transpose)
    # p_ref: (P_ROWS, P_COLS)  packed static parameters (layout above)
    # o_ref: (1, L_OUT, LIN_OUT)
    x = x_ref[0]                                      # (3, 8), time on lanes
    p = p_ref[...]                                    # (31, 8)

    # One tiny one-hot matmul folds: the (K-1) zero padding, all K shifts, and the
    # lane->sublane move of the time axis (the transpose the wrapper used to do):
    #   xpadT[i, c] = x[c, i - (K-1)]   (0 outside the valid range)
    spad = p[R_S:R_S + L_PAD, 0:L]                    # (12, 8), one-hot / zero rows
    xpadT = lax.dot_general(
        spad, x, (((1,), (1,)), ((), ())),            # NT matmul: contract over L
        preferred_element_type=jnp.float32,
        precision=lax.Precision.HIGHEST)              # exact f32 (one-hot * x)
    # xpadT: (L_PAD, C_IN) = (12, 3), time on sublanes.

    # ConvTranspose1d(3 -> 8, K=3, stride=1, pad=0):
    #   v1t[t, o] = b_ct[o] + sum_{c,k} x[c, t-k] * w_ct[c, o, k]
    # done as 9 exact-f32 VPU outer-product FMAs (contraction depth 9 is far too
    # small to pay MXU push/pop latency for).
    acc = p[R_BC:R_BC + 1, 0:C_OUT]                   # (1, 8) conv bias
    for c in range(C_IN):                             # static loops: 3 * 3 iters
        xc = xpadT[:, c:c + 1]                        # (12, 1)
        for k in range(K):
            s = (K - 1) - k
            w_row = p[R_WC + c * K + k:R_WC + c * K + k + 1, 0:C_OUT]   # (1, 8)
            acc = acc + xc[s:s + L_OUT, :] * w_row    # (10,1)*(1,8) -> (10, 8)
    r = jnp.maximum(acc, 0.0)                         # ReLU, (L_OUT, C_OUT)

    # Linear(8 -> 3) over the permuted activations, again as VPU FMAs:
    #   out[t, j] = b_lin[j] + sum_o r[t, o] * w_lin[j, o]
    out = p[R_BL:R_BL + 1, 0:LIN_OUT]                 # (1, 3) linear bias
    for o in range(C_OUT):                            # static, 8 iters
        w_row = p[R_WL + o:R_WL + o + 1, 0:LIN_OUT]   # (1, 3)
        out = out + r[:, o:o + 1] * w_row             # (10,1)*(1,3) -> (10, 3)

    o_ref[0] = jax.nn.sigmoid(out)                    # (L_OUT, LIN_OUT)


def pack_params(w_ct, b_ct, w_lin, b_lin):
    """One-time packing of all static parameters (plus the one-hot pad/shift/transpose
    matrix) into a single (P_ROWS, P_COLS) f32 slab -> one parameter DMA per call."""
    w_ct = np.asarray(w_ct, np.float32)       # (C_IN, C_OUT, K)
    b_ct = np.asarray(b_ct, np.float32)       # (C_OUT,)
    w_lin = np.asarray(w_lin, np.float32)     # (LIN_OUT, C_OUT)
    b_lin = np.asarray(b_lin, np.float32)     # (LIN_OUT,)
    p = np.zeros((P_ROWS, P_COLS), np.float32)
    for i in range(L_PAD):                    # one-hot gather matrix
        l = i - (K - 1)
        if 0 <= l < L:
            p[R_S + i, l] = 1.0
    for c in range(C_IN):
        for k in range(K):
            p[R_WC + c * K + k, :C_OUT] = w_ct[c, :, k]
    p[R_BC, :C_OUT] = b_ct
    p[R_WL:R_WL + C_OUT, :LIN_OUT] = w_lin.T
    p[R_BL, :LIN_OUT] = b_lin
    return jnp.asarray(p)


@jax.jit
def model_forward(x, packed_params):
    # No per-call glue ops (no transpose, no concat): x goes straight into the kernel
    # channels-first; the kernel folds the transpose + padding itself.  N == 1 -> no
    # grid; everything fits in a handful of vregs, so no scratch either.
    cost = pl.CostEstimate(
        flops=N * (2 * L_PAD * L * C_IN               # one-hot gather matmul
                   + 2 * L_OUT * C_OUT * C_IN * K     # conv-transpose FMAs
                   + 2 * L_OUT * C_OUT * LIN_OUT      # linear FMAs
                   + 2 * L_OUT * C_OUT),              # bias + relu epilogue
        transcendentals=N * L_OUT * LIN_OUT,          # sigmoid
        bytes_accessed=(N * C_IN * L + P_ROWS * P_COLS + N * L_OUT * LIN_OUT) * 4,
    )
    return pl.pallas_call(
        fused_kernel,
        out_shape=jax.ShapeDtypeStruct((N, L_OUT, LIN_OUT), jnp.float32),
        in_specs=[
            pl.BlockSpec(memory_space=pltpu.MemorySpace.VMEM),   # whole x in VMEM
            pl.BlockSpec(memory_space=pltpu.MemorySpace.VMEM),   # whole param slab in VMEM
        ],
        out_specs=pl.BlockSpec(memory_space=pltpu.MemorySpace.VMEM),
        cost_estimate=cost,
    )(x, packed_params)


def reference(x, w_ct, b_ct, w_lin, b_lin):
    # Independent NumPy reference of the intended torch semantics.
    x = np.asarray(x); w_ct = np.asarray(w_ct); b_ct = np.asarray(b_ct)
    w_lin = np.asarray(w_lin); b_lin = np.asarray(b_lin)
    v1 = np.zeros((N, C_OUT, L_OUT), np.float32)
    for n in range(N):
        for o in range(C_OUT):
            for t in range(L_OUT):
                s = b_ct[o]
                for c in range(C_IN):
                    for k in range(K):
                        src = t - k
                        if 0 <= src < L:
                            s += x[n, c, src] * w_ct[c, o, k]
                v1[n, o, t] = s
    v2 = np.maximum(v1, 0.0)
    v2t = np.transpose(v2, (0, 2, 1))                 # (N, L_OUT, C_OUT)
    v3 = v2t @ w_lin.T + b_lin                        # Linear(8, 3)
    return 1.0 / (1.0 + np.exp(-v3))                  # sigmoid


if __name__ == "__main__":
    key = jax.random.PRNGKey(0)
    kx, kw1, kb1, kw2, kb2 = jax.random.split(key, 5)

    # Input (matches torch.randn(1, 3, 8)) and deterministic parameters.
    x1 = jax.random.normal(kx, (N, C_IN, L), dtype=jnp.float32)
    w_ct = 0.1 * jax.random.normal(kw1, (C_IN, C_OUT, K), dtype=jnp.float32)   # ConvT weight
    b_ct = 0.1 * jax.random.normal(kb1, (C_OUT,), dtype=jnp.float32)
    w_lin = 0.1 * jax.random.normal(kw2, (LIN_OUT, C_OUT), dtype=jnp.float32)  # Linear(8, 3)
    b_lin = 0.1 * jax.random.normal(kb2, (LIN_OUT,), dtype=jnp.float32)

    # Static parameter packing happens once at setup time (not in the per-call path).
    packed = jax.block_until_ready(pack_params(w_ct, b_ct, w_lin, b_lin))

    out = model_forward(x1, packed)
    out = jax.block_until_ready(out)

    ref = reference(x1, w_ct, b_ct, w_lin, b_lin)
    assert out.shape == (N, L_OUT, LIN_OUT), out.shape
    assert np.allclose(np.asarray(out), ref, atol=1e-5, rtol=1e-5), \
        f"max abs err {np.max(np.abs(np.asarray(out) - ref))}"

    print("KERNEL_OK")
</pallas_src>

<mosaic_0001>
module attributes {stable_mosaic.version = 11 : i64} {
  func.func @fused_kernel(%arg0: memref<1x3x8xf32, #tpu.memory_space<vmem>>, %arg1: memref<31x8xf32, #tpu.memory_space<vmem>>, %arg2: memref<1x10x3xf32, #tpu.memory_space<vmem>>) attributes {dimension_semantics = [], scalar_prefetch = 0 : i64, scratch_operands = 0 : i64, tpu.core_type = #tpu.core_type<tc>} {
    %c0 = arith.constant 0 : index
    %c0_0 = arith.constant 0 : index
    %c0_1 = arith.constant 0 : index
    %0 = vector.load %arg0[%c0, %c0_0, %c0_1] : memref<1x3x8xf32, #tpu.memory_space<vmem>>, vector<1x3x8xf32>
    %1 = vector.shape_cast %0 : vector<1x3x8xf32> to vector<3x8xf32>
    %c0_2 = arith.constant 0 : index
    %c0_3 = arith.constant 0 : index
    %2 = vector.load %arg1[%c0_2, %c0_3] : memref<31x8xf32, #tpu.memory_space<vmem>>, vector<31x8xf32>
    %3 = vector.extract_strided_slice %2 {offsets = [0, 0], sizes = [12, 8], strides = [1, 1]} : vector<31x8xf32> to vector<12x8xf32>
    %cst = arith.constant dense<0.000000e+00> : vector<12x3xf32>
    %4 = tpu.matmul %3, %1, %cst {dimension_numbers = #tpu.dot_dimension_numbers<[1], [1], [0], [0], [0, 0, 1, 0], [], []>, precision = #tpu.contract_precision<fp32>} : vector<12x8xf32>, vector<3x8xf32>, vector<12x3xf32> -> vector<12x3xf32>
    %5 = vector.extract_strided_slice %2 {offsets = [21, 0], sizes = [1, 8], strides = [1, 1]} : vector<31x8xf32> to vector<1x8xf32>
    %6 = vector.extract_strided_slice %4 {offsets = [0, 0], sizes = [12, 1], strides = [1, 1]} : vector<12x3xf32> to vector<12x1xf32>
    %7 = vector.extract_strided_slice %2 {offsets = [12, 0], sizes = [1, 8], strides = [1, 1]} : vector<31x8xf32> to vector<1x8xf32>
    %8 = vector.extract_strided_slice %6 {offsets = [2, 0], sizes = [10, 1], strides = [1, 1]} : vector<12x1xf32> to vector<10x1xf32>
    %9 = vector.broadcast %8 : vector<10x1xf32> to vector<10x8xf32>
    %10 = vector.broadcast %7 : vector<1x8xf32> to vector<10x8xf32>
    %11 = arith.mulf %9, %10 : vector<10x8xf32>
    %12 = vector.broadcast %5 : vector<1x8xf32> to vector<10x8xf32>
    %13 = arith.addf %12, %11 : vector<10x8xf32>
    %14 = vector.extract_strided_slice %2 {offsets = [13, 0], sizes = [1, 8], strides = [1, 1]} : vector<31x8xf32> to vector<1x8xf32>
    %15 = vector.extract_strided_slice %6 {offsets = [1, 0], sizes = [10, 1], strides = [1, 1]} : vector<12x1xf32> to vector<10x1xf32>
    %16 = vector.broadcast %15 : vector<10x1xf32> to vector<10x8xf32>
    %17 = vector.broadcast %14 : vector<1x8xf32> to vector<10x8xf32>
    %18 = arith.mulf %16, %17 : vector<10x8xf32>
    %19 = arith.addf %13, %18 : vector<10x8xf32>
    %20 = vector.extract_strided_slice %2 {offsets = [14, 0], sizes = [1, 8], strides = [1, 1]} : vector<31x8xf32> to vector<1x8xf32>
    %21 = vector.extract_strided_slice %6 {offsets = [0, 0], sizes = [10, 1], strides = [1, 1]} : vector<12x1xf32> to vector<10x1xf32>
    %22 = vector.broadcast %21 : vector<10x1xf32> to vector<10x8xf32>
    %23 = vector.broadcast %20 : vector<1x8xf32> to vector<10x8xf32>
    %24 = arith.mulf %22, %23 : vector<10x8xf32>
    %25 = arith.addf %19, %24 : vector<10x8xf32>
    %26 = vector.extract_strided_slice %4 {offsets = [0, 1], sizes = [12, 1], strides = [1, 1]} : vector<12x3xf32> to vector<12x1xf32>
    %27 = vector.extract_strided_slice %2 {offsets = [15, 0], sizes = [1, 8], strides = [1, 1]} : vector<31x8xf32> to vector<1x8xf32>
    %28 = vector.extract_strided_slice %26 {offsets = [2, 0], sizes = [10, 1], strides = [1, 1]} : vector<12x1xf32> to vector<10x1xf32>
    %29 = vector.broadcast %28 : vector<10x1xf32> to vector<10x8xf32>
    %30 = vector.broadcast %27 : vector<1x8xf32> to vector<10x8xf32>
    %31 = arith.mulf %29, %30 : vector<10x8xf32>
    %32 = arith.addf %25, %31 : vector<10x8xf32>
    %33 = vector.extract_strided_slice %2 {offsets = [16, 0], sizes = [1, 8], strides = [1, 1]} : vector<31x8xf32> to vector<1x8xf32>
    %34 = vector.extract_strided_slice %26 {offsets = [1, 0], sizes = [10, 1], strides = [1, 1]} : vector<12x1xf32> to vector<10x1xf32>
    %35 = vector.broadcast %34 : vector<10x1xf32> to vector<10x8xf32>
    %36 = vector.broadcast %33 : vector<1x8xf32> to vector<10x8xf32>
    %37 = arith.mulf %35, %36 : vector<10x8xf32>
    %38 = arith.addf %32, %37 : vector<10x8xf32>
    %39 = vector.extract_strided_slice %2 {offsets = [17, 0], sizes = [1, 8], strides = [1, 1]} : vector<31x8xf32> to vector<1x8xf32>
    %40 = vector.extract_strided_slice %26 {offsets = [0, 0], sizes = [10, 1], strides = [1, 1]} : vector<12x1xf32> to vector<10x1xf32>
    %41 = vector.broadcast %40 : vector<10x1xf32> to vector<10x8xf32>
    %42 = vector.broadcast %39 : vector<1x8xf32> to vector<10x8xf32>
    %43 = arith.mulf %41, %42 : vector<10x8xf32>
    %44 = arith.addf %38, %43 : vector<10x8xf32>
    %45 = vector.extract_strided_slice %4 {offsets = [0, 2], sizes = [12, 1], strides = [1, 1]} : vector<12x3xf32> to vector<12x1xf32>
    %46 = vector.extract_strided_slice %2 {offsets = [18, 0], sizes = [1, 8], strides = [1, 1]} : vector<31x8xf32> to vector<1x8xf32>
    %47 = vector.extract_strided_slice %45 {offsets = [2, 0], sizes = [10, 1], strides = [1, 1]} : vector<12x1xf32> to vector<10x1xf32>
    %48 = vector.broadcast %47 : vector<10x1xf32> to vector<10x8xf32>
    %49 = vector.broadcast %46 : vector<1x8xf32> to vector<10x8xf32>
    %50 = arith.mulf %48, %49 : vector<10x8xf32>
    %51 = arith.addf %44, %50 : vector<10x8xf32>
    %52 = vector.extract_strided_slice %2 {offsets = [19, 0], sizes = [1, 8], strides = [1, 1]} : vector<31x8xf32> to vector<1x8xf32>
    %53 = vector.extract_strided_slice %45 {offsets = [1, 0], sizes = [10, 1], strides = [1, 1]} : vector<12x1xf32> to vector<10x1xf32>
    %54 = vector.broadcast %53 : vector<10x1xf32> to vector<10x8xf32>
    %55 = vector.broadcast %52 : vector<1x8xf32> to vector<10x8xf32>
    %56 = arith.mulf %54, %55 : vector<10x8xf32>
    %57 = arith.addf %51, %56 : vector<10x8xf32>
    %58 = vector.extract_strided_slice %2 {offsets = [20, 0], sizes = [1, 8], strides = [1, 1]} : vector<31x8xf32> to vector<1x8xf32>
    %59 = vector.extract_strided_slice %45 {offsets = [0, 0], sizes = [10, 1], strides = [1, 1]} : vector<12x1xf32> to vector<10x1xf32>
    %60 = vector.broadcast %59 : vector<10x1xf32> to vector<10x8xf32>
    %61 = vector.broadcast %58 : vector<1x8xf32> to vector<10x8xf32>
    %62 = arith.mulf %60, %61 : vector<10x8xf32>
    %63 = arith.addf %57, %62 : vector<10x8xf32>
    %cst_4 = arith.constant 0.000000e+00 : f32
    %64 = vector.broadcast %cst_4 : f32 to vector<10x8xf32>
    %65 = arith.maximumf %63, %64 : vector<10x8xf32>
    %66 = vector.extract_strided_slice %2 {offsets = [30, 0], sizes = [1, 3], strides = [1, 1]} : vector<31x8xf32> to vector<1x3xf32>
    %67 = vector.extract_strided_slice %2 {offsets = [22, 0], sizes = [1, 3], strides = [1, 1]} : vector<31x8xf32> to vector<1x3xf32>
    %68 = vector.extract_strided_slice %65 {offsets = [0, 0], sizes = [10, 1], strides = [1, 1]} : vector<10x8xf32> to vector<10x1xf32>
    %69 = vector.broadcast %68 : vector<10x1xf32> to vector<10x3xf32>
    %70 = vector.broadcast %67 : vector<1x3xf32> to vector<10x3xf32>
    %71 = arith.mulf %69, %70 : vector<10x3xf32>
    %72 = vector.broadcast %66 : vector<1x3xf32> to vector<10x3xf32>
    %73 = arith.addf %72, %71 : vector<10x3xf32>
    %74 = vector.extract_strided_slice %2 {offsets = [23, 0], sizes = [1, 3], strides = [1, 1]} : vector<31x8xf32> to vector<1x3xf32>
    %75 = vector.extract_strided_slice %65 {offsets = [0, 1], sizes = [10, 1], strides = [1, 1]} : vector<10x8xf32> to vector<10x1xf32>
    %76 = vector.broadcast %75 : vector<10x1xf32> to vector<10x3xf32>
    %77 = vector.broadcast %74 : vector<1x3xf32> to vector<10x3xf32>
    %78 = arith.mulf %76, %77 : vector<10x3xf32>
    %79 = arith.addf %73, %78 : vector<10x3xf32>
    %80 = vector.extract_strided_slice %2 {offsets = [24, 0], sizes = [1, 3], strides = [1, 1]} : vector<31x8xf32> to vector<1x3xf32>
    %81 = vector.extract_strided_slice %65 {offsets = [0, 2], sizes = [10, 1], strides = [1, 1]} : vector<10x8xf32> to vector<10x1xf32>
    %82 = vector.broadcast %81 : vector<10x1xf32> to vector<10x3xf32>
    %83 = vector.broadcast %80 : vector<1x3xf32> to vector<10x3xf32>
    %84 = arith.mulf %82, %83 : vector<10x3xf32>
    %85 = arith.addf %79, %84 : vector<10x3xf32>
    %86 = vector.extract_strided_slice %2 {offsets = [25, 0], sizes = [1, 3], strides = [1, 1]} : vector<31x8xf32> to vector<1x3xf32>
    %87 = vector.extract_strided_slice %65 {offsets = [0, 3], sizes = [10, 1], strides = [1, 1]} : vector<10x8xf32> to vector<10x1xf32>
    %88 = vector.broadcast %87 : vector<10x1xf32> to vector<10x3xf32>
    %89 = vector.broadcast %86 : vector<1x3xf32> to vector<10x3xf32>
    %90 = arith.mulf %88, %89 : vector<10x3xf32>
    %91 = arith.addf %85, %90 : vector<10x3xf32>
    %92 = vector.extract_strided_slice %2 {offsets = [26, 0], sizes = [1, 3], strides = [1, 1]} : vector<31x8xf32> to vector<1x3xf32>
    %93 = vector.extract_strided_slice %65 {offsets = [0, 4], sizes = [10, 1], strides = [1, 1]} : vector<10x8xf32> to vector<10x1xf32>
    %94 = vector.broadcast %93 : vector<10x1xf32> to vector<10x3xf32>
    %95 = vector.broadcast %92 : vector<1x3xf32> to vector<10x3xf32>
    %96 = arith.mulf %94, %95 : vector<10x3xf32>
    %97 = arith.addf %91, %96 : vector<10x3xf32>
    %98 = vector.extract_strided_slice %2 {offsets = [27, 0], sizes = [1, 3], strides = [1, 1]} : vector<31x8xf32> to vector<1x3xf32>
    %99 = vector.extract_strided_slice %65 {offsets = [0, 5], sizes = [10, 1], strides = [1, 1]} : vector<10x8xf32> to vector<10x1xf32>
    %100 = vector.broadcast %99 : vector<10x1xf32> to vector<10x3xf32>
    %101 = vector.broadcast %98 : vector<1x3xf32> to vector<10x3xf32>
    %102 = arith.mulf %100, %101 : vector<10x3xf32>
    %103 = arith.addf %97, %102 : vector<10x3xf32>
    %104 = vector.extract_strided_slice %2 {offsets = [28, 0], sizes = [1, 3], strides = [1, 1]} : vector<31x8xf32> to vector<1x3xf32>
    %105 = vector.extract_strided_slice %65 {offsets = [0, 6], sizes = [10, 1], strides = [1, 1]} : vector<10x8xf32> to vector<10x1xf32>
    %106 = vector.broadcast %105 : vector<10x1xf32> to vector<10x3xf32>
    %107 = vector.broadcast %104 : vector<1x3xf32> to vector<10x3xf32>
    %108 = arith.mulf %106, %107 : vector<10x3xf32>
    %109 = arith.addf %103, %108 : vector<10x3xf32>
    %110 = vector.extract_strided_slice %2 {offsets = [29, 0], sizes = [1, 3], strides = [1, 1]} : vector<31x8xf32> to vector<1x3xf32>
    %111 = vector.extract_strided_slice %65 {offsets = [0, 7], sizes = [10, 1], strides = [1, 1]} : vector<10x8xf32> to vector<10x1xf32>
    %112 = vector.broadcast %111 : vector<10x1xf32> to vector<10x3xf32>
    %113 = vector.broadcast %110 : vector<1x3xf32> to vector<10x3xf32>
    %114 = arith.mulf %112, %113 : vector<10x3xf32>
    %115 = arith.addf %109, %114 : vector<10x3xf32>
    %116 = arith.negf %115 : vector<10x3xf32>
    %117 = math.exp %116 : vector<10x3xf32>
    %cst_5 = arith.constant 1.000000e+00 : f32
    %118 = vector.broadcast %cst_5 : f32 to vector<10x3xf32>
    %119 = arith.addf %118, %117 : vector<10x3xf32>
    %120 = arith.divf %118, %119 : vector<10x3xf32>
    %c0_6 = arith.constant 0 : index
    %c0_7 = arith.constant 0 : index
    %c0_8 = arith.constant 0 : index
    %121 = vector.load %arg2[%c0_6, %c0_7, %c0_8] : memref<1x10x3xf32, #tpu.memory_space<vmem>>, vector<1x10x3xf32>
    %122 = vector.shape_cast %121 : vector<1x10x3xf32> to vector<10x3xf32>
    %123 = vector.shape_cast %120 : vector<10x3xf32> to vector<1x10x3xf32>
    tpu.vector_store %arg2[%c0_6, %c0_7, %c0_8], %123 {strides = array<i32>} : memref<1x10x3xf32, #tpu.memory_space<vmem>>, vector<1x10x3xf32>,
    return
  }
}

</mosaic_0001>

<llo_original>
// kernel: model_forward.1
$region0: #{model_forward.1}
  #allocation0 [shape = 'u32[]', space=smem, size = 0x4, offset = 0x4, fixed_abs, tag = 'smem constant byte address 0x4 - core index']
  #allocation1 [shape = 'u32[144,128]{1,0:T(1,128)}', space=vmem, size = 0x12000, scoped, tag = 'internal scratch']
  %s0 = inlined_call_operand.vmem [shape: f32[1,3,8], index: 0, kind: input, shape index: {}]
  %s1 = inlined_call_operand.vmem [shape: f32[31,8], index: 1, kind: input, shape index: {}]
  %s2 = inlined_call_operand.vmem [shape: f32[1,10,3], index: 2, kind: output, shape index: {}]
  %s3 = sld [smem:[#allocation0]]
  $region18: #{model_forward.1} parent=0
    _
  %s5 = ssub.s32 1, %s3
  %s6 = scalar_select 0, %s5, %s3
  // Predicated region
  $region2: #{model_forward.1} parent=0 // pred_check
    _
  $region3: #{model_forward.1} parent=0 // pred_check_branch
    %8 = sbr.rel (0) target = $region5
  $region4: #{model_forward.1} parent=0 // pred_region
    _
  $region5: #{model_forward.1} parent=0 // pred_fallthru
    _
  // Predicated region
  $region6: #{model_forward.1} parent=0 // pred_check
    _
  $region7: #{model_forward.1} parent=0 // pred_check_branch
    %10 = sbr.rel (0) target = $region9
  $region8: #{model_forward.1} parent=0 // pred_region
    _
  $region9: #{model_forward.1} parent=0 // pred_fallthru
    _
  %v11 = vld [vmem:[%s0] sm:$0x7]
  %v12 = vld [vmem:[%s1] sm:$0xff]
  %v13 = vld [vmem:[%s1 + $0x8] sm:$0xff]
  %v14 = vld [vmem:[%s1 + $0x10] sm:$0xff]
  %v15 = vld [vmem:[%s1 + $0x18] sm:$0x7f]
  %vm16 = vcmask 64512
  %v18 = vsel %vm16, %v12, 0
  %v21 = vsel %vm16, %v13, 0
  %v24 = vsel %vm16, %v11, 0
  %26 = vmatprep.subr.mxu0 0.0
  %27 = vmatpush1.xpose.msra.mxu0 0.0
  %28 = vmatprep.subr.mxu0 0.0
  %29 = vmatpush1.xpose.msra.mxu0 0.0
  %30 = vmatprep.subr.mxu0 0.0
  %31 = vmatpush1.xpose.msra.mxu0 0.0
  %32 = vmatprep.subr.mxu0 0.0
  %33 = vmatpush1.xpose.msra.mxu0 0.0
  %34 = vmatprep.subr.mxu0 0.0
  %35 = vmatpush1.xpose.msra.mxu0 0.0
  %36 = vmatprep.subr.mxu0 0.0
  %37 = vmatpush1.xpose.msra.mxu0 0.0
  %38 = vmatprep.subr.mxu0 0.0
  %39 = vmatpush1.xpose.msra.mxu0 0.0
  %40 = vmatprep.subr.mxu0 0.0
  %41 = vmatpush1.xpose.msra.mxu0 0.0
  %42 = vmatprep.subr.mxu0 0.0
  %43 = vmatpush1.xpose.msra.mxu0 0.0
  %44 = vmatprep.subr.mxu0 0.0
  %45 = vmatpush1.xpose.msra.mxu0 0.0
  %46 = vmatprep.subr.mxu0 0.0
  %47 = vmatpush1.xpose.msra.mxu0 0.0
  %48 = vmatprep.subr.mxu0 0.0
  %49 = vmatpush1.xpose.msra.mxu0 0.0
  %50 = vmatprep.subr.mxu0 0.0
  %51 = vmatpush1.xpose.msra.mxu0 0.0
  %52 = vmatprep.subr.mxu0 0.0
  %53 = vmatpush1.xpose.msra.mxu0 0.0
  %54 = vmatprep.subr.mxu0 0.0
  %55 = vmatpush1.xpose.msra.mxu0 0.0
  %56 = vmatprep.subr.mxu0 0.0
  %v57 = vand.u32 %v24, 4294901760
  %58 = vmatpush1.xpose.msra.mxu0 %v57
  %59 = vmatprep.subr.mxu0 0.0
  %60 = vmatpush2.xpose.msra.mxu0 0.0
  %61 = vmatprep.subr.mxu0 0.0
  %62 = vmatpush2.xpose.msra.mxu0 0.0
  %63 = vmatprep.subr.mxu0 0.0
  %64 = vmatpush2.xpose.msra.mxu0 0.0
  %65 = vmatprep.subr.mxu0 0.0
  %66 = vmatpush2.xpose.msra.mxu0 0.0
  %67 = vmatprep.subr.mxu0 0.0
  %68 = vmatpush2.xpose.msra.mxu0 0.0
  %69 = vmatprep.subr.mxu0 0.0
  %70 = vmatpush2.xpose.msra.mxu0 0.0
  %71 = vmatprep.subr.mxu0 0.0
  %72 = vmatpush2.xpose.msra.mxu0 0.0
  %73 = vmatprep.subr.mxu0 0.0
  %74 = vmatpush2.xpose.msra.mxu0 0.0
  %75 = vmatprep.subr.mxu0 0.0
  %76 = vmatpush2.xpose.msra.mxu0 0.0
  %77 = vmatprep.subr.mxu0 0.0
  %78 = vmatpush2.xpose.msra.mxu0 0.0
  %79 = vmatprep.subr.mxu0 0.0
  %80 = vmatpush2.xpose.msra.mxu0 0.0
  %81 = vmatprep.subr.mxu0 0.0
  %82 = vmatpush2.xpose.msra.mxu0 0.0
  %83 = vmatprep.subr.mxu0 0.0
  %84 = vmatpush2.xpose.msra.mxu0 0.0
  %85 = vmatprep.subr.mxu0 0.0
  %86 = vmatpush2.xpose.msra.mxu0 0.0
  %87 = vmatprep.subr.mxu0 0.0
  %88 = vmatpush2.xpose.msra.mxu0 0.0
  %89 = vmatprep.subr.mxu0 0.0
  %90 = vmatpush2.xpose.msra.mxu0 0.0
  %91 = vmatprep.mubr.f32.mxu0 0.0
  %v92 = vand.u32 %v18, 4294901760
  %v93 = vsub.f32 %v18, %v92
  %v94 = vand.u32 %v93, 4294901760
  %v95 = vsub.f32 %v93, %v94
  %v96 = vand.u32 %v95, 4294901760
  %97 = vmatmul.mubr.f32.gmra.mxu0 %v96
  %v98 = vpop.f32.mrf.mxu0
  %v99 = vadd.f32 0.0, %v98
  %v100 = vpop.f32.mrf.mxu0
  %101 = vmatprep.mubr.f32.mxu0 0.0
  %v102 = vand.u32 %v21, 4294901760
  %v103 = vsub.f32 %v21, %v102
  %v104 = vand.u32 %v103, 4294901760
  %v105 = vsub.f32 %v103, %v104
  %v106 = vand.u32 %v105, 4294901760
  %107 = vmatmul.mubr.f32.gmra.mxu0 %v106
  %v108 = vpop.f32.mrf.mxu0
  %v109 = vadd.f32 0.0, %v108
  %v110 = vpop.f32.mrf.mxu0
  %111 = vdwg.mxu0
  %112 = vmatprep.subr.mxu0 0.0
  %113 = vmatpush1.xpose.msra.mxu0 0.0
  %114 = vmatprep.subr.mxu0 0.0
  %115 = vmatpush1.xpose.msra.mxu0 0.0
  %116 = vmatprep.subr.mxu0 0.0
  %117 = vmatpush1.xpose.msra.mxu0 0.0
  %118 = vmatprep.subr.mxu0 0.0
  %119 = vmatpush1.xpose.msra.mxu0 0.0
  %120 = vmatprep.subr.mxu0 0.0
  %121 = vmatpush1.xpose.msra.mxu0 0.0
  %122 = vmatprep.subr.mxu0 0.0
  %123 = vmatpush1.xpose.msra.mxu0 0.0
  %124 = vmatprep.subr.mxu0 0.0
  %125 = vmatpush1.xpose.msra.mxu0 0.0
  %126 = vmatprep.subr.mxu0 0.0
  %127 = vmatpush1.xpose.msra.mxu0 0.0
  %128 = vmatprep.subr.mxu0 0.0
  %129 = vmatpush1.xpose.msra.mxu0 0.0
  %130 = vmatprep.subr.mxu0 0.0
  %131 = vmatpush1.xpose.msra.mxu0 0.0
  %132 = vmatprep.subr.mxu0 0.0
  %133 = vmatpush1.xpose.msra.mxu0 0.0
  %134 = vmatprep.subr.mxu0 0.0
  %135 = vmatpush1.xpose.msra.mxu0 0.0
  %136 = vmatprep.subr.mxu0 0.0
  %137 = vmatpush1.xpose.msra.mxu0 0.0
  %138 = vmatprep.subr.mxu0 0.0
  %139 = vmatpush1.xpose.msra.mxu0 0.0
  %140 = vmatprep.subr.mxu0 0.0
  %141 = vmatpush1.xpose.msra.mxu0 0.0
  %142 = vmatprep.subr.mxu0 0.0
  %v143 = vand.u32 %v24, 4294901760
  %v144 = vsub.f32 %v24, %v143
  %v145 = vand.u32 %v144, 4294901760
  %v146 = vsub.f32 %v144, %v145
  %v147 = vand.u32 %v146, 4294901760
  %148 = vmatpush1.xpose.msra.mxu0 %v147
  %149 = vmatprep.subr.mxu0 0.0
  %150 = vmatpush2.xpose.msra.mxu0 0.0
  %151 = vmatprep.subr.mxu0 0.0
  %152 = vmatpush2.xpose.msra.mxu0 0.0
  %153 = vmatprep.subr.mxu0 0.0
  %154 = vmatpush2.xpose.msra.mxu0 0.0
  %155 = vmatprep.subr.mxu0 0.0
  %156 = vmatpush2.xpose.msra.mxu0 0.0
  %157 = vmatprep.subr.mxu0 0.0
  %158 = vmatpush2.xpose.msra.mxu0 0.0
  %159 = vmatprep.subr.mxu0 0.0
  %160 = vmatpush2.xpose.msra.mxu0 0.0
  %161 = vmatprep.subr.mxu0 0.0
  %162 = vmatpush2.xpose.msra.mxu0 0.0
  %163 = vmatprep.subr.mxu0 0.0
  %164 = vmatpush2.xpose.msra.mxu0 0.0
  %165 = vmatprep.subr.mxu0 0.0
  %166 = vmatpush2.xpose.msra.mxu0 0.0
  %167 = vmatprep.subr.mxu0 0.0
  %168 = vmatpush2.xpose.msra.mxu0 0.0
  %169 = vmatprep.subr.mxu0 0.0
  %170 = vmatpush2.xpose.msra.mxu0 0.0
  %171 = vmatprep.subr.mxu0 0.0
  %172 = vmatpush2.xpose.msra.mxu0 0.0
  %173 = vmatprep.subr.mxu0 0.0
  %174 = vmatpush2.xpose.msra.mxu0 0.0
  %175 = vmatprep.subr.mxu0 0.0
  %176 = vmatpush2.xpose.msra.mxu0 0.0
  %177 = vmatprep.subr.mxu0 0.0
  %178 = vmatpush2.xpose.msra.mxu0 0.0
  %179 = vmatprep.subr.mxu0 0.0
  %180 = vmatpush2.xpose.msra.mxu0 0.0
  %181 = vmatprep.mubr.f32.mxu0 0.0
  %v182 = vand.u32 %v18, 4294901760
  %183 = vmatmul.mubr.f32.gmra.mxu0 %v182
  %v184 = vpop.f32.mrf.mxu0
  %v185 = vadd.f32 %v99, %v184
  %v186 = vpop.f32.mrf.mxu0
  %187 = vmatprep.mubr.f32.mxu0 0.0
  %v188 = vand.u32 %v21, 4294901760
  %189 = vmatmul.mubr.f32.gmra.mxu0 %v188
  %v190 = vpop.f32.mrf.mxu0
  %v191 = vadd.f32 %v109, %v190
  %v192 = vpop.f32.mrf.mxu0
  %193 = vdwg.mxu0
  %194 = vmatprep.subr.mxu0 0.0
  %195 = vmatpush1.xpose.msra.mxu0 0.0
  %196 = vmatprep.subr.mxu0 0.0
  %197 = vmatpush1.xpose.msra.mxu0 0.0
  %198 = vmatprep.subr.mxu0 0.0
  %199 = vmatpush1.xpose.msra.mxu0 0.0
  %200 = vmatprep.subr.mxu0 0.0
  %201 = vmatpush1.xpose.msra.mxu0 0.0
  %202 = vmatprep.subr.mxu0 0.0
  %203 = vmatpush1.xpose.msra.mxu0 0.0
  %204 = vmatprep.subr.mxu0 0.0
  %205 = vmatpush1.xpose.msra.mxu0 0.0
  %206 = vmatprep.subr.mxu0 0.0
  %207 = vmatpush1.xpose.msra.mxu0 0.0
  %208 = vmatprep.subr.mxu0 0.0
  %209 = vmatpush1.xpose.msra.mxu0 0.0
  %210 = vmatprep.subr.mxu0 0.0
  %211 = vmatpush1.xpose.msra.mxu0 0.0
  %212 = vmatprep.subr.mxu0 0.0
  %213 = vmatpush1.xpose.msra.mxu0 0.0
  %214 = vmatprep.subr.mxu0 0.0
  %215 = vmatpush1.xpose.msra.mxu0 0.0
  %216 = vmatprep.subr.mxu0 0.0
  %217 = vmatpush1.xpose.msra.mxu0 0.0
  %218 = vmatprep.subr.mxu0 0.0
  %219 = vmatpush1.xpose.msra.mxu0 0.0
  %220 = vmatprep.subr.mxu0 0.0
  %221 = vmatpush1.xpose.msra.mxu0 0.0
  %222 = vmatprep.subr.mxu0 0.0
  %223 = vmatpush1.xpose.msra.mxu0 0.0
  %224 = vmatprep.subr.mxu0 0.0
  %v225 = vand.u32 %v24, 4294901760
  %v226 = vsub.f32 %v24, %v225
  %227 = vmatpush1.xpose.msra.mxu0 %v226
  %228 = vmatprep.subr.mxu0 0.0
  %229 = vmatpush2.xpose.msra.mxu0 0.0
  %230 = vmatprep.subr.mxu0 0.0
  %231 = vmatpush2.xpose.msra.mxu0 0.0
  %232 = vmatprep.subr.mxu0 0.0
  %233 = vmatpush2.xpose.msra.mxu0 0.0
  %234 = vmatprep.subr.mxu0 0.0
  %235 = vmatpush2.xpose.msra.mxu0 0.0
  %236 = vmatprep.subr.mxu0 0.0
  %237 = vmatpush2.xpose.msra.mxu0 0.0
  %238 = vmatprep.subr.mxu0 0.0
  %239 = vmatpush2.xpose.msra.mxu0 0.0
  %240 = vmatprep.subr.mxu0 0.0
  %241 = vmatpush2.xpose.msra.mxu0 0.0
  %242 = vmatprep.subr.mxu0 0.0
  %243 = vmatpush2.xpose.msra.mxu0 0.0
  %244 = vmatprep.subr.mxu0 0.0
  %245 = vmatpush2.xpose.msra.mxu0 0.0
  %246 = vmatprep.subr.mxu0 0.0
  %247 = vmatpush2.xpose.msra.mxu0 0.0
  %248 = vmatprep.subr.mxu0 0.0
  %249 = vmatpush2.xpose.msra.mxu0 0.0
  %250 = vmatprep.subr.mxu0 0.0
  %251 = vmatpush2.xpose.msra.mxu0 0.0
  %252 = vmatprep.subr.mxu0 0.0
  %253 = vmatpush2.xpose.msra.mxu0 0.0
  %254 = vmatprep.subr.mxu0 0.0
  %255 = vmatpush2.xpose.msra.mxu0 0.0
  %256 = vmatprep.subr.mxu0 0.0
  %257 = vmatpush2.xpose.msra.mxu0 0.0
  %258 = vmatprep.subr.mxu0 0.0
  %259 = vmatpush2.xpose.msra.mxu0 0.0
  %260 = vmatprep.mubr.f32.mxu0 0.0
  %v261 = vand.u32 %v18, 4294901760
  %v262 = vsub.f32 %v18, %v261
  %263 = vmatmul.mubr.f32.gmra.mxu0 %v262
  %v264 = vpop.f32.mrf.mxu0
  %v265 = vadd.f32 %v185, %v264
  %v266 = vpop.f32.mrf.mxu0
  %267 = vmatprep.mubr.f32.mxu0 0.0
  %v268 = vand.u32 %v21, 4294901760
  %v269 = vsub.f32 %v21, %v268
  %270 = vmatmul.mubr.f32.gmra.mxu0 %v269
  %v271 = vpop.f32.mrf.mxu0
  %v272 = vadd.f32 %v191, %v271
  %v273 = vpop.f32.mrf.mxu0
  %274 = vdwg.mxu0
  %275 = vmatprep.subr.mxu0 0.0
  %276 = vmatpush1.xpose.msra.mxu0 0.0
  %277 = vmatprep.subr.mxu0 0.0
  %278 = vmatpush1.xpose.msra.mxu0 0.0
  %279 = vmatprep.subr.mxu0 0.0
  %280 = vmatpush1.xpose.msra.mxu0 0.0
  %281 = vmatprep.subr.mxu0 0.0
  %282 = vmatpush1.xpose.msra.mxu0 0.0
  %283 = vmatprep.subr.mxu0 0.0
  %284 = vmatpush1.xpose.msra.mxu0 0.0
  %285 = vmatprep.subr.mxu0 0.0
  %286 = vmatpush1.xpose.msra.mxu0 0.0
  %287 = vmatprep.subr.mxu0 0.0
  %288 = vmatpush1.xpose.msra.mxu0 0.0
  %289 = vmatprep.subr.mxu0 0.0
  %290 = vmatpush1.xpose.msra.mxu0 0.0
  %291 = vmatprep.subr.mxu0 0.0
  %292 = vmatpush1.xpose.msra.mxu0 0.0
  %293 = vmatprep.subr.mxu0 0.0
  %294 = vmatpush1.xpose.msra.mxu0 0.0
  %295 = vmatprep.subr.mxu0 0.0
  %296 = vmatpush1.xpose.msra.mxu0 0.0
  %297 = vmatprep.subr.mxu0 0.0
  %298 = vmatpush1.xpose.msra.mxu0 0.0
  %299 = vmatprep.subr.mxu0 0.0
  %300 = vmatpush1.xpose.msra.mxu0 0.0
  %301 = vmatprep.subr.mxu0 0.0
  %302 = vmatpush1.xpose.msra.mxu0 0.0
  %303 = vmatprep.subr.mxu0 0.0
  %304 = vmatpush1.xpose.msra.mxu0 0.0
  %305 = vmatprep.subr.mxu0 0.0
  %v306 = vand.u32 %v24, 4294901760
  %307 = vmatpush1.xpose.msra.mxu0 %v306
  %308 = vmatprep.subr.mxu0 0.0
  %309 = vmatpush2.xpose.msra.mxu0 0.0
  %310 = vmatprep.subr.mxu0 0.0
  %311 = vmatpush2.xpose.msra.mxu0 0.0
  %312 = vmatprep.subr.mxu0 0.0
  %313 = vmatpush2.xpose.msra.mxu0 0.0
  %314 = vmatprep.subr.mxu0 0.0
  %315 = vmatpush2.xpose.msra.mxu0 0.0
  %316 = vmatprep.subr.mxu0 0.0
  %317 = vmatpush2.xpose.msra.mxu0 0.0
  %318 = vmatprep.subr.mxu0 0.0
  %319 = vmatpush2.xpose.msra.mxu0 0.0
  %320 = vmatprep.subr.mxu0 0.0
  %321 = vmatpush2.xpose.msra.mxu0 0.0
  %322 = vmatprep.subr.mxu0 0.0
  %323 = vmatpush2.xpose.msra.mxu0 0.0
  %324 = vmatprep.subr.mxu0 0.0
  %325 = vmatpush2.xpose.msra.mxu0 0.0
  %326 = vmatprep.subr.mxu0 0.0
  %327 = vmatpush2.xpose.msra.mxu0 0.0
  %328 = vmatprep.subr.mxu0 0.0
  %329 = vmatpush2.xpose.msra.mxu0 0.0
  %330 = vmatprep.subr.mxu0 0.0
  %331 = vmatpush2.xpose.msra.mxu0 0.0
  %332 = vmatprep.subr.mxu0 0.0
  %333 = vmatpush2.xpose.msra.mxu0 0.0
  %334 = vmatprep.subr.mxu0 0.0
  %335 = vmatpush2.xpose.msra.mxu0 0.0
  %336 = vmatprep.subr.mxu0 0.0
  %337 = vmatpush2.xpose.msra.mxu0 0.0
  %338 = vmatprep.subr.mxu0 0.0
  %339 = vmatpush2.xpose.msra.mxu0 0.0
  %340 = vmatprep.mubr.f32.mxu0 0.0
  %v341 = vand.u32 %v18, 4294901760
  %v342 = vsub.f32 %v18, %v341
  %v343 = vand.u32 %v342, 4294901760
  %344 = vmatmul.mubr.f32.gmra.mxu0 %v343
  %v345 = vpop.f32.mrf.mxu0
  %v346 = vadd.f32 %v265, %v345
  %v347 = vpop.f32.mrf.mxu0
  %348 = vmatprep.mubr.f32.mxu0 0.0
  %v349 = vand.u32 %v21, 4294901760
  %v350 = vsub.f32 %v21, %v349
  %v351 = vand.u32 %v350, 4294901760
  %352 = vmatmul.mubr.f32.gmra.mxu0 %v351
  %v353 = vpop.f32.mrf.mxu0
  %v354 = vadd.f32 %v272, %v353
  %v355 = vpop.f32.mrf.mxu0
  %356 = vdwg.mxu0
  %357 = vmatprep.subr.mxu0 0.0
  %358 = vmatpush1.xpose.msra.mxu0 0.0
  %359 = vmatprep.subr.mxu0 0.0
  %360 = vmatpush1.xpose.msra.mxu0 0.0
  %361 = vmatprep.subr.mxu0 0.0
  %362 = vmatpush1.xpose.msra.mxu0 0.0
  %363 = vmatprep.subr.mxu0 0.0
  %364 = vmatpush1.xpose.msra.mxu0 0.0
  %365 = vmatprep.subr.mxu0 0.0
  %366 = vmatpush1.xpose.msra.mxu0 0.0
  %367 = vmatprep.subr.mxu0 0.0
  %368 = vmatpush1.xpose.msra.mxu0 0.0
  %369 = vmatprep.subr.mxu0 0.0
  %370 = vmatpush1.xpose.msra.mxu0 0.0
  %371 = vmatprep.subr.mxu0 0.0
  %372 = vmatpush1.xpose.msra.mxu0 0.0
  %373 = vmatprep.subr.mxu0 0.0
  %374 = vmatpush1.xpose.msra.mxu0 0.0
  %375 = vmatprep.subr.mxu0 0.0
  %376 = vmatpush1.xpose.msra.mxu0 0.0
  %377 = vmatprep.subr.mxu0 0.0
  %378 = vmatpush1.xpose.msra.mxu0 0.0
  %379 = vmatprep.subr.mxu0 0.0
  %380 = vmatpush1.xpose.msra.mxu0 0.0
  %381 = vmatprep.subr.mxu0 0.0
  %382 = vmatpush1.xpose.msra.mxu0 0.0
  %383 = vmatprep.subr.mxu0 0.0
  %384 = vmatpush1.xpose.msra.mxu0 0.0
  %385 = vmatprep.subr.mxu0 0.0
  %386 = vmatpush1.xpose.msra.mxu0 0.0
  %387 = vmatprep.subr.mxu0 0.0
  %v388 = vand.u32 %v24, 4294901760
  %v389 = vsub.f32 %v24, %v388
  %v390 = vand.u32 %v389, 4294901760
  %391 = vmatpush1.xpose.msra.mxu0 %v390
  %392 = vmatprep.subr.mxu0 0.0
  %393 = vmatpush2.xpose.msra.mxu0 0.0
  %394 = vmatprep.subr.mxu0 0.0
  %395 = vmatpush2.xpose.msra.mxu0 0.0
  %396 = vmatprep.subr.mxu0 0.0
  %397 = vmatpush2.xpose.msra.mxu0 0.0
  %398 = vmatprep.subr.mxu0 0.0
  %399 = vmatpush2.xpose.msra.mxu0 0.0
  %400 = vmatprep.subr.mxu0 0.0
  %401 = vmatpush2.xpose.msra.mxu0 0.0
  %402 = vmatprep.subr.mxu0 0.0
  %403 = vmatpush2.xpose.msra.mxu0 0.0
  %404 = vmatprep.subr.mxu0 0.0
  %405 = vmatpush2.xpose.msra.mxu0 0.0
  %406 = vmatprep.subr.mxu0 0.0
  %407 = vmatpush2.xpose.msra.mxu0 0.0
  %408 = vmatprep.subr.mxu0 0.0
  %409 = vmatpush2.xpose.msra.mxu0 0.0
  %410 = vmatprep.subr.mxu0 0.0
  %411 = vmatpush2.xpose.msra.mxu0 0.0
  %412 = vmatprep.subr.mxu0 0.0
  %413 = vmatpush2.xpose.msra.mxu0 0.0
  %414 = vmatprep.subr.mxu0 0.0
  %415 = vmatpush2.xpose.msra.mxu0 0.0
  %416 = vmatprep.subr.mxu0 0.0
  %417 = vmatpush2.xpose.msra.mxu0 0.0
  %418 = vmatprep.subr.mxu0 0.0
  %419 = vmatpush2.xpose.msra.mxu0 0.0
  %420 = vmatprep.subr.mxu0 0.0
  %421 = vmatpush2.xpose.msra.mxu0 0.0
  %422 = vmatprep.subr.mxu0 0.0
  %423 = vmatpush2.xpose.msra.mxu0 0.0
  %424 = vmatprep.mubr.f32.mxu0 0.0
  %v425 = vand.u32 %v18, 4294901760
  %426 = vmatmul.mubr.f32.gmra.mxu0 %v425
  %v427 = vpop.f32.mrf.mxu0
  %v428 = vadd.f32 %v346, %v427
  %v429 = vpop.f32.mrf.mxu0
  %430 = vmatprep.mubr.f32.mxu0 0.0
  %v431 = vand.u32 %v21, 4294901760
  %432 = vmatmul.mubr.f32.gmra.mxu0 %v431
  %v433 = vpop.f32.mrf.mxu0
  %v434 = vadd.f32 %v354, %v433
  %v435 = vpop.f32.mrf.mxu0
  %436 = vdwg.mxu0
  %437 = vmatprep.subr.mxu0 0.0
  %438 = vmatpush1.xpose.msra.mxu0 0.0
  %439 = vmatprep.subr.mxu0 0.0
  %440 = vmatpush1.xpose.msra.mxu0 0.0
  %441 = vmatprep.subr.mxu0 0.0
  %442 = vmatpush1.xpose.msra.mxu0 0.0
  %443 = vmatprep.subr.mxu0 0.0
  %444 = vmatpush1.xpose.msra.mxu0 0.0
  %445 = vmatprep.subr.mxu0 0.0
  %446 = vmatpush1.xpose.msra.mxu0 0.0
  %447 = vmatprep.subr.mxu0 0.0
  %448 = vmatpush1.xpose.msra.mxu0 0.0
  %449 = vmatprep.subr.mxu0 0.0
  %450 = vmatpush1.xpose.msra.mxu0 0.0
  %451 = vmatprep.subr.mxu0 0.0
  %452 = vmatpush1.xpose.msra.mxu0 0.0
  %453 = vmatprep.subr.mxu0 0.0
  %454 = vmatpush1.xpose.msra.mxu0 0.0
  %455 = vmatprep.subr.mxu0 0.0
  %456 = vmatpush1.xpose.msra.mxu0 0.0
  %457 = vmatprep.subr.mxu0 0.0
  %458 = vmatpush1.xpose.msra.mxu0 0.0
  %459 = vmatprep.subr.mxu0 0.0
  %460 = vmatpush1.xpose.msra.mxu0 0.0
  %461 = vmatprep.subr.mxu0 0.0
  %462 = vmatpush1.xpose.msra.mxu0 0.0
  %463 = vmatprep.subr.mxu0 0.0
  %464 = vmatpush1.xpose.msra.mxu0 0.0
  %465 = vmatprep.subr.mxu0 0.0
  %466 = vmatpush1.xpose.msra.mxu0 0.0
  %467 = vmatprep.subr.mxu0 0.0
  %v468 = vand.u32 %v24, 4294901760
  %469 = vmatpush1.xpose.msra.mxu0 %v468
  %470 = vmatprep.subr.mxu0 0.0
  %471 = vmatpush2.xpose.msra.mxu0 0.0
  %472 = vmatprep.subr.mxu0 0.0
  %473 = vmatpush2.xpose.msra.mxu0 0.0
  %474 = vmatprep.subr.mxu0 0.0
  %475 = vmatpush2.xpose.msra.mxu0 0.0
  %476 = vmatprep.subr.mxu0 0.0
  %477 = vmatpush2.xpose.msra.mxu0 0.0
  %478 = vmatprep.subr.mxu0 0.0
  %479 = vmatpush2.xpose.msra.mxu0 0.0
  %480 = vmatprep.subr.mxu0 0.0
  %481 = vmatpush2.xpose.msra.mxu0 0.0
  %482 = vmatprep.subr.mxu0 0.0
  %483 = vmatpush2.xpose.msra.mxu0 0.0
  %484 = vmatprep.subr.mxu0 0.0
  %485 = vmatpush2.xpose.msra.mxu0 0.0
  %486 = vmatprep.subr.mxu0 0.0
  %487 = vmatpush2.xpose.msra.mxu0 0.0
  %488 = vmatprep.subr.mxu0 0.0
  %489 = vmatpush2.xpose.msra.mxu0 0.0
  %490 = vmatprep.subr.mxu0 0.0
  %491 = vmatpush2.xpose.msra.mxu0 0.0
  %492 = vmatprep.subr.mxu0 0.0
  %493 = vmatpush2.xpose.msra.mxu0 0.0
  %494 = vmatprep.subr.mxu0 0.0
  %495 = vmatpush2.xpose.msra.mxu0 0.0
  %496 = vmatprep.subr.mxu0 0.0
  %497 = vmatpush2.xpose.msra.mxu0 0.0
  %498 = vmatprep.subr.mxu0 0.0
  %499 = vmatpush2.xpose.msra.mxu0 0.0
  %500 = vmatprep.subr.mxu0 0.0
  %501 = vmatpush2.xpose.msra.mxu0 0.0
  %502 = vmatprep.mubr.f32.mxu0 0.0
  %v503 = vand.u32 %v18, 4294901760
  %504 = vmatmul.mubr.f32.gmra.mxu0 %v503
  %v505 = vpop.f32.mrf.mxu0
  %v506 = vadd.f32 %v428, %v505
  %v507 = vpop.f32.mrf.mxu0
  %508 = vmatprep.mubr.f32.mxu0 0.0
  %v509 = vand.u32 %v21, 4294901760
  %510 = vmatmul.mubr.f32.gmra.mxu0 %v509
  %v511 = vpop.f32.mrf.mxu0
  %v512 = vadd.f32 %v434, %v511
  %v513 = vpop.f32.mrf.mxu0
  %514 = vdwg.mxu0
  %516 = vset.pattern.permute.xlu0 0
  %517 = vperm.xlu0 %516, %v506
  %v518 = vpop.permute.xlu0 %517
  %521 = vset.pattern.permute.xlu0 0
  %522 = vperm.xlu0 %521, %v512
  %v523 = vpop.permute.xlu0 %522
  %v525 = vlaneseq
  %v526 = vshrl.u32 %v525, 7
  %v527 = vsub.s32 4, %v526
  %v528 = vrot.slane %v13, %v527
  %v529 = vmul.f32 %v518, %v528
  %v530 = vmul.f32 %v523, %v528
  %v531 = vlaneseq
  %v532 = vshrl.u32 %v531, 7
  %v533 = vsub.s32 5, %v532
  %v534 = vrot.slane %v14, %v533
  %v535 = vadd.f32 %v534, %v529
  %v536 = vadd.f32 %v534, %v530
  %v537 = vlaneseq
  %v538 = vshrl.u32 %v537, 7
  %v539 = vsub.s32 5, %v538
  %v540 = vrot.slane %v13, %v539
  %v541 = vmul.f32 %v518, %v540
  %v542 = vmul.f32 %v523, %v540
  %vm545 = vcmask 1040384
  %v546 = vrot.slane %v541, 7
  %v547 = vrot.slane %v542, 7
  %v548 = vsel %vm545, %v546, %v547
  %v551 = vadd.f32 %v535, %v546
  %v552 = vadd.f32 %v536, %v548
  %v553 = vlaneseq
  %v554 = vshrl.u32 %v553, 7
  %v555 = vsub.s32 6, %v554
  %v556 = vrot.slane %v13, %v555
  %v557 = vmul.f32 %v518, %v556
  %v558 = vmul.f32 %v523, %v556
  %vm561 = vcmask 1041408
  %v562 = vrot.slane %v557, 6
  %v563 = vrot.slane %v558, 6
  %v564 = vsel %vm561, %v562, %v563
  %v567 = vadd.f32 %v551, %v562
  %v568 = vadd.f32 %v552, %v564
  %569 = vset.pattern.permute.xlu0 1
  %570 = vperm.xlu0 %569, %v506
  %v571 = vpop.permute.xlu0 %570
  %573 = vset.pattern.permute.xlu0 1
  %574 = vperm.xlu0 %573, %v512
  %v575 = vpop.permute.xlu0 %574
  %v577 = vlaneseq
  %v578 = vshrl.u32 %v577, 7
  %v579 = vsub.s32 7, %v578
  %v580 = vrot.slane %v13, %v579
  %v581 = vmul.f32 %v571, %v580
  %v582 = vmul.f32 %v575, %v580
  %v583 = vadd.f32 %v567, %v581
  %v584 = vadd.f32 %v568, %v582
  %v585 = vlaneseq
  %v586 = vshrl.u32 %v585, 7
  %v587 = vsub.s32 0, %v586
  %v588 = vrot.slane %v14, %v587
  %v589 = vmul.f32 %v571, %v588
  %v590 = vmul.f32 %v575, %v588
  %v593 = vrot.slane %v589, 7
  %v594 = vrot.slane %v590, 7
  %v595 = vsel %vm545, %v593, %v594
  %v598 = vadd.f32 %v583, %v593
  %v599 = vadd.f32 %v584, %v595
  %v600 = vlaneseq
  %v601 = vshrl.u32 %v600, 7
  %v602 = vsub.s32 1, %v601
  %v603 = vrot.slane %v14, %v602
  %v604 = vmul.f32 %v571, %v603
  %v605 = vmul.f32 %v575, %v603
  %v608 = vrot.slane %v604, 6
  %v609 = vrot.slane %v605, 6
  %v610 = vsel %vm561, %v608, %v609
  %v613 = vadd.f32 %v598, %v608
  %v614 = vadd.f32 %v599, %v610
  %615 = vset.pattern.permute.xlu0 2
  %616 = vperm.xlu0 %615, %v506
  %v617 = vpop.permute.xlu0 %616
  %619 = vset.pattern.permute.xlu0 2
  %620 = vperm.xlu0 %619, %v512
  %v621 = vpop.permute.xlu0 %620
  %v623 = vlaneseq
  %v624 = vshrl.u32 %v623, 7
  %v625 = vsub.s32 2, %v624
  %v626 = vrot.slane %v14, %v625
  %v627 = vmul.f32 %v617, %v626
  %v628 = vmul.f32 %v621, %v626
  %v629 = vadd.f32 %v613, %v627
  %v630 = vadd.f32 %v614, %v628
  %v631 = vlaneseq
  %v632 = vshrl.u32 %v631, 7
  %v633 = vsub.s32 3, %v632
  %v634 = vrot.slane %v14, %v633
  %v635 = vmul.f32 %v617, %v634
  %v636 = vmul.f32 %v621, %v634
  %v639 = vrot.slane %v635, 7
  %v640 = vrot.slane %v636, 7
  %v641 = vsel %vm545, %v639, %v640
  %v644 = vadd.f32 %v629, %v639
  %v645 = vadd.f32 %v630, %v641
  %v646 = vlaneseq
  %v647 = vshrl.u32 %v646, 7
  %v648 = vsub.s32 4, %v647
  %v649 = vrot.slane %v14, %v648
  %v650 = vmul.f32 %v617, %v649
  %v651 = vmul.f32 %v621, %v649
  %v654 = vrot.slane %v650, 6
  %v655 = vrot.slane %v651, 6
  %v656 = vsel %vm561, %v654, %v655
  %v659 = vadd.f32 %v644, %v654
  %v660 = vadd.f32 %v645, %v656
  %v661 = vmax.f32 %v659, 0.0
  %v662 = vmax.f32 %v660, 0.0
  %664 = vset.pattern.permute.xlu0 0
  %665 = vperm.xlu0 %664, %v661
  %v666 = vpop.permute.xlu0 %665
  %669 = vset.pattern.permute.xlu0 0
  %670 = vperm.xlu0 %669, %v662
  %v671 = vpop.permute.xlu0 %670
  %v673 = vlaneseq
  %v674 = vshrl.u32 %v673, 7
  %v675 = vsub.s32 6, %v674
  %v676 = vrot.slane %v14, %v675
  %v677 = vmul.f32 %v666, %v676
  %v678 = vmul.f32 %v671, %v676
  %v679 = vlaneseq
  %v680 = vshrl.u32 %v679, 7
  %v681 = vsub.s32 6, %v680
  %v682 = vrot.slane %v15, %v681
  %v683 = vadd.f32 %v682, %v677
  %v684 = vadd.f32 %v682, %v678
  %685 = vset.pattern.permute.xlu0 1
  %686 = vperm.xlu0 %685, %v661
  %v687 = vpop.permute.xlu0 %686
  %689 = vset.pattern.permute.xlu0 1
  %690 = vperm.xlu0 %689, %v662
  %v691 = vpop.permute.xlu0 %690
  %v693 = vlaneseq
  %v694 = vshrl.u32 %v693, 7
  %v695 = vsub.s32 7, %v694
  %v696 = vrot.slane %v14, %v695
  %v697 = vmul.f32 %v687, %v696
  %v698 = vmul.f32 %v691, %v696
  %v699 = vadd.f32 %v683, %v697
  %v700 = vadd.f32 %v684, %v698
  %701 = vset.pattern.permute.xlu0 2
  %702 = vperm.xlu0 %701, %v661
  %v703 = vpop.permute.xlu0 %702
  %705 = vset.pattern.permute.xlu0 2
  %706 = vperm.xlu0 %705, %v662
  %v707 = vpop.permute.xlu0 %706
  %v709 = vlaneseq
  %v710 = vshrl.u32 %v709, 7
  %v711 = vsub.s32 0, %v710
  %v712 = vrot.slane %v15, %v711
  %v713 = vmul.f32 %v703, %v712
  %v714 = vmul.f32 %v707, %v712
  %v715 = vadd.f32 %v699, %v713
  %v716 = vadd.f32 %v700, %v714
  %717 = vset.pattern.permute.xlu0 3
  %718 = vperm.xlu0 %717, %v661
  %v719 = vpop.permute.xlu0 %718
  %721 = vset.pattern.permute.xlu0 3
  %722 = vperm.xlu0 %721, %v662
  %v723 = vpop.permute.xlu0 %722
  %v725 = vlaneseq
  %v726 = vshrl.u32 %v725, 7
  %v727 = vsub.s32 1, %v726
  %v728 = vrot.slane %v15, %v727
  %v729 = vmul.f32 %v719, %v728
  %v730 = vmul.f32 %v723, %v728
  %v731 = vadd.f32 %v715, %v729
  %v732 = vadd.f32 %v716, %v730
  %733 = vset.pattern.permute.xlu0 4
  %734 = vperm.xlu0 %733, %v661
  %v735 = vpop.permute.xlu0 %734
  %737 = vset.pattern.permute.xlu0 4
  %738 = vperm.xlu0 %737, %v662
  %v739 = vpop.permute.xlu0 %738
  %v741 = vlaneseq
  %v742 = vshrl.u32 %v741, 7
  %v743 = vsub.s32 2, %v742
  %v744 = vrot.slane %v15, %v743
  %v745 = vmul.f32 %v735, %v744
  %v746 = vmul.f32 %v739, %v744
  %v747 = vadd.f32 %v731, %v745
  %v748 = vadd.f32 %v732, %v746
  %749 = vset.pattern.permute.xlu0 5
  %750 = vperm.xlu0 %749, %v661
  %v751 = vpop.permute.xlu0 %750
  %753 = vset.pattern.permute.xlu0 5
  %754 = vperm.xlu0 %753, %v662
  %v755 = vpop.permute.xlu0 %754
  %v757 = vlaneseq
  %v758 = vshrl.u32 %v757, 7
  %v759 = vsub.s32 3, %v758
  %v760 = vrot.slane %v15, %v759
  %v761 = vmul.f32 %v751, %v760
  %v762 = vmul.f32 %v755, %v760
  %v763 = vadd.f32 %v747, %v761
  %v764 = vadd.f32 %v748, %v762
  %765 = vset.pattern.permute.xlu0 6
  %766 = vperm.xlu0 %765, %v661
  %v767 = vpop.permute.xlu0 %766
  %769 = vset.pattern.permute.xlu0 6
  %770 = vperm.xlu0 %769, %v662
  %v771 = vpop.permute.xlu0 %770
  %v773 = vlaneseq
  %v774 = vshrl.u32 %v773, 7
  %v775 = vsub.s32 4, %v774
  %v776 = vrot.slane %v15, %v775
  %v777 = vmul.f32 %v767, %v776
  %v778 = vmul.f32 %v771, %v776
  %v779 = vadd.f32 %v763, %v777
  %v780 = vadd.f32 %v764, %v778
  %781 = vset.pattern.permute.xlu0 7
  %782 = vperm.xlu0 %781, %v661
  %v783 = vpop.permute.xlu0 %782
  %785 = vset.pattern.permute.xlu0 7
  %786 = vperm.xlu0 %785, %v662
  %v787 = vpop.permute.xlu0 %786
  %v789 = vlaneseq
  %v790 = vshrl.u32 %v789, 7
  %v791 = vsub.s32 5, %v790
  %v792 = vrot.slane %v15, %v791
  %v793 = vmul.f32 %v783, %v792
  %v794 = vmul.f32 %v787, %v792
  %v795 = vadd.f32 %v779, %v793
  %v796 = vadd.f32 %v780, %v794
  %v797 = vxor.u32 %v795, 2147483648
  %v798 = vxor.u32 %v796, 2147483648
  %v799 = vmul.f32 %v797, 1.442695
  %v800 = vpow.pop %v799
  %v801 = vmul.f32 %v798, 1.442695
  %v802 = vpow.pop %v801
  %v803 = vadd.f32 %v800, 1.0
  %v804 = vadd.f32 %v802, 1.0
  %v805 = vrcp.pop %v803
  %v806 = vmul.f32 1.0, %v805
  %v807 = vrcp.pop %v804
  %v808 = vmul.f32 1.0, %v807
  %vm809 = vcmask 23554
  %810 = vst.msk [vmem:[%s2 - $0x2] sm:$0xfc] %vm809, %v806
  %vm811 = vcmask 19456
  %812 = vst.msk [vmem:[%s2 + $0x6] sm:$0xf] %vm811, %v808
  // Predicated region
  $region10: #{model_forward.1} parent=0 // pred_check
    _
  $region11: #{model_forward.1} parent=0 // pred_check_branch
    %814 = sbr.rel (0) target = $region13
  $region12: #{model_forward.1} parent=0 // pred_region
    _
  $region13: #{model_forward.1} parent=0 // pred_fallthru
    _
  // Predicated region
  $region14: #{model_forward.1} parent=0 // pred_check
    _
  $region15: #{model_forward.1} parent=0 // pred_check_branch
    %816 = sbr.rel (0) target = $region17
  $region16: #{model_forward.1} parent=0 // pred_region
    _
  $region17: #{model_forward.1} parent=0 // pred_fallthru
    _

</llo_original>
